<compile_context>
chip_gen: v7x
topology: tpu7x:2x2x1
jax: 0.10.0
libtpu: 0.0.40
codegen_flags: <defaults>
</compile_context>

<pallas_src>
import functools

import jax
import jax.numpy as jnp
from jax import lax
from jax.experimental import pallas as pl
from jax.experimental.pallas import tpu as pltpu

K = 16    # Conv1d kernel size == stride (frame size)
H1 = 32   # first conv channels
H2 = 32   # second conv channels
LEAKY_SLOPE = 0.3


def _leaky_relu(x):
    # 2-op LeakyReLU (valid because 0 < slope < 1).
    return jnp.maximum(x, LEAKY_SLOPE * x)


def _wave_adv_kernel(fr_ref,                  # (cpb, K, chunk_n) framed waveform block (bf16)
                     w1_ref, b1_ref, w2_ref, b2_ref, w3_ref, b3_ref,
                     out_ref,                 # (1, 128) per-pass loss slab
                     acc_lab_ref, acc_zero_ref,   # (1, chunk_n) f32 per-lane partial sums
                     *, n_valid, chunk_n, cpb, unroll):
    # Grid position: read ONLY at kernel top level (not inside pl.when / fori bodies).
    p = pl.program_id(0)          # 0 = real pass, 1 = fake pass
    i = pl.program_id(1)          # frame-block index (reduction axis)
    n_blk = pl.num_programs(1)

    @pl.when(i == 0)
    def _init():
        acc_lab_ref[...] = jnp.zeros_like(acc_lab_ref)
        acc_zero_ref[...] = jnp.zeros_like(acc_zero_ref)

    label = 1.0 - 2.0 * p.astype(jnp.float32)     # +1 (real pass) / -1 (fake pass)

    # Hoist weight/bias loads (and the lane iota) out of the chunk loop.
    w1 = w1_ref[...]          # (H1, K)  bf16
    w2 = w2_ref[...]          # (H2, H1) bf16
    w3 = w3_ref[...]          # (8, H2)  bf16 (row 0 = w3^T, rows 1..7 zero)
    b1 = b1_ref[...]          # (H1, 1)  f32
    b2 = b2_ref[...]          # (H2, 1)  f32
    b3 = b3_ref[...]          # (1, 1)   f32
    lane = lax.broadcasted_iota(jnp.int32, (1, chunk_n), 1)
    block_base = i * (cpb * chunk_n)

    def body(c, carry):
        s_lab, s_zero = carry
        x = fr_ref[c]                                                        # (K, cn) bf16
        h1 = _leaky_relu(jnp.dot(w1, x, preferred_element_type=jnp.float32) + b1)
        h2 = _leaky_relu(jnp.dot(w2, h1.astype(jnp.bfloat16),
                                 preferred_element_type=jnp.float32) + b2)
        # Final 1-channel projection on the MXU (row 0 of a padded 8-row matmul).
        d8 = jnp.dot(w3, h2.astype(jnp.bfloat16),
                     preferred_element_type=jnp.float32)                     # (8, cn)
        d = d8[0:1, :] + b3                                                  # (1, cn)
        valid = (block_base + c * chunk_n + lane) < n_valid                  # mask padding
        e = d - label
        s_lab = s_lab + jnp.where(valid, e * e, 0.0)
        s_zero = s_zero + jnp.where(valid, d * d, 0.0)
        return s_lab, s_zero

    zeros = jnp.zeros((1, chunk_n), jnp.float32)
    s_lab, s_zero = lax.fori_loop(0, cpb, body, (zeros, zeros), unroll=unroll)
    acc_lab_ref[...] += s_lab
    acc_zero_ref[...] += s_zero

    @pl.when(i == n_blk - 1)
    def _finalize():
        inv_n = 1.0 / float(n_valid)
        mse_lab = jnp.sum(acc_lab_ref[...], keepdims=True) * inv_n    # (1,1) mean((d-label)^2)
        mse_zero = jnp.sum(acc_zero_ref[...], keepdims=True) * inv_n  # (1,1) mean(d^2)
        out_lane = lax.broadcasted_iota(jnp.int32, (1, 128), 1)
        out_ref[...] = (jnp.where(out_lane == 0, mse_lab, 0.0)
                        + jnp.where(out_lane == 1, mse_zero, 0.0))


@functools.partial(jax.jit, static_argnames=("block_n", "chunk_n"))
def wave_adversarial_loss(x_real, x_fake, params, *, block_n=32768, chunk_n=512):
    """Forward of WaveAdversarialLoss (grad=True, loss='L2'):
    returns {'g_loss', 'd_real_loss', 'd_fake_loss'} scalars."""
    assert x_real.shape == x_fake.shape and x_real.ndim == 2
    assert chunk_n % 128 == 0 and block_n % chunk_n == 0
    B, T = x_real.shape
    Tf = T // K                   # torch Conv1d(stride=K): trailing samples dropped
    assert Tf >= 1, "waveform shorter than one frame"
    N = B * Tf
    cpb = block_n // chunk_n      # chunks per grid block
    unroll = cpb if cpb <= 8 else 8
    assert cpb % unroll == 0
    n_blocks = (N + block_n - 1) // block_n
    N_pad = n_blocks * block_n
    n_chunks_tot = N_pad // chunk_n

    def _frame(x):
        # (B, T) -> (n_chunks, K, chunk_n): conv taps on sublanes, frames lane-dense,
        # chunk index leading so the kernel walks chunks via a leading-dim index.
        # bf16 halves the HBM traffic of this framing pass.
        fr = x[:, :Tf * K].astype(jnp.bfloat16).reshape(B * Tf, K)
        if N_pad > N:
            fr = jnp.pad(fr, ((0, N_pad - N), (0, 0)))
        return fr.reshape(n_chunks_tot, chunk_n, K).transpose(0, 2, 1)

    frames_all = jnp.stack([_frame(x_real), _frame(x_fake)], axis=0)  # (2, nc, K, cn) bf16

    bf16 = jnp.bfloat16
    w1 = params["w1"].astype(bf16)                                          # (H1, K)
    w2 = params["w2"].astype(bf16)                                          # (H2, H1)
    # Final projection as an MXU matmul: zero-pad w3^T to 8 output rows.
    w3p = jnp.zeros((8, H2), jnp.float32).at[0, :].set(params["w3"][:, 0]).astype(bf16)
    b1, b2, b3 = params["b1"], params["b2"], params["b3"]                   # f32

    kernel = functools.partial(_wave_adv_kernel, n_valid=N, chunk_n=chunk_n,
                               cpb=cpb, unroll=unroll)

    const = lambda p, i: (0, 0)       # weights stay resident across the whole grid
    grid_spec = pltpu.PrefetchScalarGridSpec(
        num_scalar_prefetch=0,
        grid=(2, n_blocks),           # (pass: real/fake, frame blocks)
        in_specs=[
            pl.BlockSpec((None, cpb, K, chunk_n), lambda p, i: (p, i, 0, 0)),
            pl.BlockSpec((H1, K), const),
            pl.BlockSpec((H1, 1), const),
            pl.BlockSpec((H2, H1), const),
            pl.BlockSpec((H2, 1), const),
            pl.BlockSpec((8, H2), const),
            pl.BlockSpec((1, 1), const),
        ],
        out_specs=pl.BlockSpec((None, 1, 128), lambda p, i: (p, 0, 0)),
        scratch_shapes=[pltpu.VMEM((1, chunk_n), jnp.float32),
                        pltpu.VMEM((1, chunk_n), jnp.float32)],
    )

    out = pl.pallas_call(
        kernel,
        out_shape=jax.ShapeDtypeStruct((2, 1, 128), jnp.float32),
        grid_spec=grid_spec,
        compiler_params=pltpu.CompilerParams(
            dimension_semantics=("parallel", "arbitrary")),
    )(frames_all, w1, b1, w2, b2, w3p, b3)

    return {
        "g_loss": out[1, 0, 1],        # fake pass, label 0
        "d_real_loss": out[0, 0, 0],   # real pass, label +1
        "d_fake_loss": out[1, 0, 0],   # fake pass, label -1
    }


def init_discriminator_params(key):
    """Deterministic synthetic discriminator weights (f32, matmul-friendly layouts)."""
    k1, k2, k3, k4, k5, k6 = jax.random.split(key, 6)
    return {
        # Conv1d(1, H1, K, stride=K): torch weight (H1, 1, K) -> (H1, K)
        "w1": (1.0 / jnp.sqrt(K)) * jax.random.normal(k1, (H1, K), jnp.float32),
        "b1": 0.1 * jax.random.normal(k2, (H1, 1), jnp.float32),
        # Conv1d(H1, H2, 1): torch weight (H2, H1, 1) -> (H2, H1)
        "w2": (1.0 / jnp.sqrt(H1)) * jax.random.normal(k3, (H2, H1), jnp.float32),
        "b2": 0.1 * jax.random.normal(k4, (H2, 1), jnp.float32),
        # Conv1d(H2, 1, 1): torch weight (1, H2, 1) -> (H2, 1) column
        "w3": (1.0 / jnp.sqrt(H2)) * jax.random.normal(k5, (H2, 1), jnp.float32),
        "b3": 0.1 * jax.random.normal(k6, (1, 1), jnp.float32),
    }


def _reference_losses(x_real, x_fake, params):
    """Pure-JAX reference of the same forward (mirrors the kernel's bf16 roundings)."""
    bf = lambda a: a.astype(jnp.bfloat16).astype(jnp.float32)
    w1, w2, w3 = bf(params["w1"]), bf(params["w2"]), bf(params["w3"])

    def disc(x):
        B, T = x.shape
        Tf = T // K
        fr = bf(x[:, :Tf * K]).reshape(B * Tf, K)                 # (N, K)
        z1 = fr @ w1.T + params["b1"].T
        h1 = bf(jnp.maximum(z1, LEAKY_SLOPE * z1))
        z2 = h1 @ w2.T + params["b2"].T
        h2 = bf(jnp.maximum(z2, LEAKY_SLOPE * z2))
        return h2 @ w3 + params["b3"]                             # (N, 1)

    d_r = disc(x_real)
    d_f = disc(x_fake)
    return {
        "g_loss": jnp.mean(d_f ** 2),
        "d_real_loss": jnp.mean((d_r - 1.0) ** 2),
        "d_fake_loss": jnp.mean((d_f + 1.0) ** 2),
    }


if __name__ == "__main__":
    key = jax.random.PRNGKey(0)
    k_real, k_fake, k_params = jax.random.split(key, 3)

    # Waveforms: torch shape (B, 1, T); the wrapper takes (B, T). T deliberately NOT a
    # multiple of K: like Conv1d(stride=K), trailing samples are dropped.
    B, T = 2, 4132
    x_real = jax.random.normal(k_real, (B, T), jnp.float32)
    x_fake = jax.random.normal(k_fake, (B, T), jnp.float32)
    params = init_discriminator_params(k_params)

    # Small block/chunk so the streamed reduction (multiple frame blocks, multiple
    # chunks per block, padded-frame masking) is exercised at these small shapes.
    out = wave_adversarial_loss(x_real, x_fake, params, block_n=512, chunk_n=256)
    jax.block_until_ready(out)

    ref = _reference_losses(x_real, x_fake, params)
    for name in ("g_loss", "d_real_loss", "d_fake_loss"):
        v, r = out[name], ref[name]
        assert v.shape == () and bool(jnp.isfinite(v)), name
        assert bool(jnp.allclose(v, r, rtol=1e-3, atol=1e-4)), (name, float(v), float(r))

    print("KERNEL_OK")
</pallas_src>

<mosaic_0001>
module attributes {stable_mosaic.version = 11 : i64} {
  func.func @_wave_adv_kernel(%arg0: i32, %arg1: i32, %arg2: memref<1x2x16x256xbf16, #tpu.memory_space<vmem>>, %arg3: memref<32x16xbf16, #tpu.memory_space<vmem>>, %arg4: memref<32x1xf32, #tpu.memory_space<vmem>>, %arg5: memref<32x32xbf16, #tpu.memory_space<vmem>>, %arg6: memref<32x1xf32, #tpu.memory_space<vmem>>, %arg7: memref<8x32xbf16, #tpu.memory_space<vmem>>, %arg8: memref<1x1xf32, #tpu.memory_space<vmem>>, %arg9: memref<1x1x128xf32, #tpu.memory_space<vmem>>, %arg10: memref<1x256xf32, #tpu.memory_space<vmem>>, %arg11: memref<1x256xf32, #tpu.memory_space<vmem>>) attributes {dimension_semantics = [#tpu.dimension_semantics<parallel>, #tpu.dimension_semantics<arbitrary>], iteration_bounds = array<i64: 2, 2>, scalar_prefetch = 0 : i64, scratch_operands = 2 : i64, tpu.core_type = #tpu.core_type<tc>, window_params = [{transform_indices = @transform_0, window_bounds = array<i64: 1, 2, 16, 256>}, {pipeline_mode = #tpu.pipeline_mode<synchronous>, transform_indices = @transform_1, window_bounds = array<i64: 32, 16>}, {pipeline_mode = #tpu.pipeline_mode<synchronous>, transform_indices = @transform_2, window_bounds = array<i64: 32, 1>}, {pipeline_mode = #tpu.pipeline_mode<synchronous>, transform_indices = @transform_3, window_bounds = array<i64: 32, 32>}, {pipeline_mode = #tpu.pipeline_mode<synchronous>, transform_indices = @transform_4, window_bounds = array<i64: 32, 1>}, {pipeline_mode = #tpu.pipeline_mode<synchronous>, transform_indices = @transform_5, window_bounds = array<i64: 8, 32>}, {pipeline_mode = #tpu.pipeline_mode<synchronous>, transform_indices = @transform_6, window_bounds = array<i64: 1, 1>}, {transform_indices = @transform_7, window_bounds = array<i64: 1, 1, 128>}]} {
    %c0_i32 = arith.constant 0 : i32
    %0 = arith.cmpi eq, %arg1, %c0_i32 : i32
    %1 = arith.extui %0 : i1 to i32
    %c0_i32_0 = arith.constant 0 : i32
    %2 = arith.cmpi ne, %1, %c0_i32_0 : i32
    scf.if %2 {
      %cst_47 = arith.constant 0.000000e+00 : f32
      %98 = vector.broadcast %cst_47 : f32 to vector<1x256xf32>
      %c0_48 = arith.constant 0 : index
      %c0_49 = arith.constant 0 : index
      %99 = vector.load %arg10[%c0_48, %c0_49] : memref<1x256xf32, #tpu.memory_space<vmem>>, vector<1x256xf32>
      tpu.vector_store %arg10[%c0_48, %c0_49], %98 {strides = array<i32>} : memref<1x256xf32, #tpu.memory_space<vmem>>, vector<1x256xf32>,
      %cst_50 = arith.constant 0.000000e+00 : f32
      %100 = vector.broadcast %cst_50 : f32 to vector<1x256xf32>
      %c0_51 = arith.constant 0 : index
      %c0_52 = arith.constant 0 : index
      %101 = vector.load %arg11[%c0_51, %c0_52] : memref<1x256xf32, #tpu.memory_space<vmem>>, vector<1x256xf32>
      tpu.vector_store %arg11[%c0_51, %c0_52], %100 {strides = array<i32>} : memref<1x256xf32, #tpu.memory_space<vmem>>, vector<1x256xf32>,
    } else {
    }
    %3 = arith.sitofp %arg0 : i32 to f32
    %cst = arith.constant 2.000000e+00 : f32
    %4 = arith.mulf %cst, %3 : f32
    %cst_1 = arith.constant 1.000000e+00 : f32
    %5 = arith.subf %cst_1, %4 : f32
    %c0 = arith.constant 0 : index
    %c0_2 = arith.constant 0 : index
    %6 = vector.load %arg3[%c0, %c0_2] : memref<32x16xbf16, #tpu.memory_space<vmem>>, vector<32x16xbf16>
    %c0_3 = arith.constant 0 : index
    %c0_4 = arith.constant 0 : index
    %7 = vector.load %arg5[%c0_3, %c0_4] : memref<32x32xbf16, #tpu.memory_space<vmem>>, vector<32x32xbf16>
    %c0_5 = arith.constant 0 : index
    %c0_6 = arith.constant 0 : index
    %8 = vector.load %arg7[%c0_5, %c0_6] : memref<8x32xbf16, #tpu.memory_space<vmem>>, vector<8x32xbf16>
    %c0_7 = arith.constant 0 : index
    %c0_8 = arith.constant 0 : index
    %9 = vector.load %arg4[%c0_7, %c0_8] : memref<32x1xf32, #tpu.memory_space<vmem>>, vector<32x1xf32>
    %c0_9 = arith.constant 0 : index
    %c0_10 = arith.constant 0 : index
    %10 = vector.load %arg6[%c0_9, %c0_10] : memref<32x1xf32, #tpu.memory_space<vmem>>, vector<32x1xf32>
    %c0_11 = arith.constant 0 : index
    %c0_12 = arith.constant 0 : index
    %11 = vector.load %arg8[%c0_11, %c0_12] : memref<1x1xf32, #tpu.memory_space<vmem>>, vector<1x1xf32>
    %12 = tpu.iota {dimensions = array<i32: 1>} : vector<1x256xi32>
    %c512_i32 = arith.constant 512 : i32
    %13 = arith.muli %arg1, %c512_i32 : i32
    %cst_13 = arith.constant 0.000000e+00 : f32
    %14 = vector.broadcast %cst_13 : f32 to vector<1x256xf32>
    %c0_i32_14 = arith.constant 0 : i32
    %c0_15 = arith.constant 0 : index
    %15 = arith.index_cast %c0_i32_14 : i32 to index
    %c0_16 = arith.constant 0 : index
    %c0_17 = arith.constant 0 : index
    %16 = vector.load %arg2[%c0_15, %15, %c0_16, %c0_17] : memref<1x2x16x256xbf16, #tpu.memory_space<vmem>>, vector<1x1x16x256xbf16>
    %17 = vector.shape_cast %16 : vector<1x1x16x256xbf16> to vector<16x256xbf16>
    %cst_18 = arith.constant dense<0.000000e+00> : vector<32x256xf32>
    %18 = tpu.matmul %6, %17, %cst_18 {dimension_numbers = #tpu.dot_dimension_numbers<[1], [0], [0], [1], [0, 0, 1, 1], [], []>} : vector<32x16xbf16>, vector<16x256xbf16>, vector<32x256xf32> -> vector<32x256xf32>
    %19 = vector.broadcast %9 : vector<32x1xf32> to vector<32x256xf32>
    %20 = arith.addf %18, %19 : vector<32x256xf32>
    %cst_19 = arith.constant 3.000000e-01 : f32
    %21 = vector.broadcast %cst_19 : f32 to vector<32x256xf32>
    %22 = arith.mulf %21, %20 : vector<32x256xf32>
    %23 = arith.maximumf %20, %22 : vector<32x256xf32>
    %24 = arith.truncf %23 : vector<32x256xf32> to vector<32x256xbf16>
    %cst_20 = arith.constant dense<0.000000e+00> : vector<32x256xf32>
    %25 = tpu.matmul %7, %24, %cst_20 {dimension_numbers = #tpu.dot_dimension_numbers<[1], [0], [0], [1], [0, 0, 1, 1], [], []>} : vector<32x32xbf16>, vector<32x256xbf16>, vector<32x256xf32> -> vector<32x256xf32>
    %26 = vector.broadcast %10 : vector<32x1xf32> to vector<32x256xf32>
    %27 = arith.addf %25, %26 : vector<32x256xf32>
    %cst_21 = arith.constant 3.000000e-01 : f32
    %28 = vector.broadcast %cst_21 : f32 to vector<32x256xf32>
    %29 = arith.mulf %28, %27 : vector<32x256xf32>
    %30 = arith.maximumf %27, %29 : vector<32x256xf32>
    %31 = arith.truncf %30 : vector<32x256xf32> to vector<32x256xbf16>
    %cst_22 = arith.constant dense<0.000000e+00> : vector<8x256xf32>
    %32 = tpu.matmul %8, %31, %cst_22 {dimension_numbers = #tpu.dot_dimension_numbers<[1], [0], [0], [1], [0, 0, 1, 1], [], []>} : vector<8x32xbf16>, vector<32x256xbf16>, vector<8x256xf32> -> vector<8x256xf32>
    %33 = vector.extract_strided_slice %32 {offsets = [0, 0], sizes = [1, 256], strides = [1, 1]} : vector<8x256xf32> to vector<1x256xf32>
    %34 = vector.broadcast %11 : vector<1x1xf32> to vector<1x256xf32>
    %35 = arith.addf %33, %34 : vector<1x256xf32>
    %c256_i32 = arith.constant 256 : i32
    %36 = arith.muli %c0_i32_14, %c256_i32 : i32
    %37 = arith.addi %13, %36 : i32
    %38 = vector.broadcast %37 : i32 to vector<1x256xi32>
    %39 = arith.addi %38, %12 : vector<1x256xi32>
    %c516_i32 = arith.constant 516 : i32
    %40 = vector.broadcast %c516_i32 : i32 to vector<1x256xi32>
    %41 = arith.cmpi slt, %39, %40 : vector<1x256xi32>
    %42 = vector.broadcast %5 : f32 to vector<1x256xf32>
    %43 = arith.subf %35, %42 : vector<1x256xf32>
    %44 = arith.mulf %43, %43 : vector<1x256xf32>
    %cst_23 = arith.constant 0.000000e+00 : f32
    %45 = vector.broadcast %cst_23 : f32 to vector<1x256xf32>
    %46 = arith.select %41, %44, %45 : vector<1x256xi1>, vector<1x256xf32>
    %47 = arith.addf %14, %46 : vector<1x256xf32>
    %48 = arith.mulf %35, %35 : vector<1x256xf32>
    %cst_24 = arith.constant 0.000000e+00 : f32
    %49 = vector.broadcast %cst_24 : f32 to vector<1x256xf32>
    %50 = arith.select %41, %48, %49 : vector<1x256xi1>, vector<1x256xf32>
    %51 = arith.addf %14, %50 : vector<1x256xf32>
    %c1_i32 = arith.constant 1 : i32
    %c0_25 = arith.constant 0 : index
    %52 = arith.index_cast %c1_i32 : i32 to index
    %c0_26 = arith.constant 0 : index
    %c0_27 = arith.constant 0 : index
    %53 = vector.load %arg2[%c0_25, %52, %c0_26, %c0_27] : memref<1x2x16x256xbf16, #tpu.memory_space<vmem>>, vector<1x1x16x256xbf16>
    %54 = vector.shape_cast %53 : vector<1x1x16x256xbf16> to vector<16x256xbf16>
    %cst_28 = arith.constant dense<0.000000e+00> : vector<32x256xf32>
    %55 = tpu.matmul %6, %54, %cst_28 {dimension_numbers = #tpu.dot_dimension_numbers<[1], [0], [0], [1], [0, 0, 1, 1], [], []>} : vector<32x16xbf16>, vector<16x256xbf16>, vector<32x256xf32> -> vector<32x256xf32>
    %56 = vector.broadcast %9 : vector<32x1xf32> to vector<32x256xf32>
    %57 = arith.addf %55, %56 : vector<32x256xf32>
    %cst_29 = arith.constant 3.000000e-01 : f32
    %58 = vector.broadcast %cst_29 : f32 to vector<32x256xf32>
    %59 = arith.mulf %58, %57 : vector<32x256xf32>
    %60 = arith.maximumf %57, %59 : vector<32x256xf32>
    %61 = arith.truncf %60 : vector<32x256xf32> to vector<32x256xbf16>
    %cst_30 = arith.constant dense<0.000000e+00> : vector<32x256xf32>
    %62 = tpu.matmul %7, %61, %cst_30 {dimension_numbers = #tpu.dot_dimension_numbers<[1], [0], [0], [1], [0, 0, 1, 1], [], []>} : vector<32x32xbf16>, vector<32x256xbf16>, vector<32x256xf32> -> vector<32x256xf32>
    %63 = vector.broadcast %10 : vector<32x1xf32> to vector<32x256xf32>
    %64 = arith.addf %62, %63 : vector<32x256xf32>
    %cst_31 = arith.constant 3.000000e-01 : f32
    %65 = vector.broadcast %cst_31 : f32 to vector<32x256xf32>
    %66 = arith.mulf %65, %64 : vector<32x256xf32>
    %67 = arith.maximumf %64, %66 : vector<32x256xf32>
    %68 = arith.truncf %67 : vector<32x256xf32> to vector<32x256xbf16>
    %cst_32 = arith.constant dense<0.000000e+00> : vector<8x256xf32>
    %69 = tpu.matmul %8, %68, %cst_32 {dimension_numbers = #tpu.dot_dimension_numbers<[1], [0], [0], [1], [0, 0, 1, 1], [], []>} : vector<8x32xbf16>, vector<32x256xbf16>, vector<8x256xf32> -> vector<8x256xf32>
    %70 = vector.extract_strided_slice %69 {offsets = [0, 0], sizes = [1, 256], strides = [1, 1]} : vector<8x256xf32> to vector<1x256xf32>
    %71 = vector.broadcast %11 : vector<1x1xf32> to vector<1x256xf32>
    %72 = arith.addf %70, %71 : vector<1x256xf32>
    %c256_i32_33 = arith.constant 256 : i32
    %73 = arith.muli %c1_i32, %c256_i32_33 : i32
    %74 = arith.addi %13, %73 : i32
    %75 = vector.broadcast %74 : i32 to vector<1x256xi32>
    %76 = arith.addi %75, %12 : vector<1x256xi32>
    %c516_i32_34 = arith.constant 516 : i32
    %77 = vector.broadcast %c516_i32_34 : i32 to vector<1x256xi32>
    %78 = arith.cmpi slt, %76, %77 : vector<1x256xi32>
    %79 = vector.broadcast %5 : f32 to vector<1x256xf32>
    %80 = arith.subf %72, %79 : vector<1x256xf32>
    %81 = arith.mulf %80, %80 : vector<1x256xf32>
    %cst_35 = arith.constant 0.000000e+00 : f32
    %82 = vector.broadcast %cst_35 : f32 to vector<1x256xf32>
    %83 = arith.select %78, %81, %82 : vector<1x256xi1>, vector<1x256xf32>
    %84 = arith.addf %47, %83 : vector<1x256xf32>
    %85 = arith.mulf %72, %72 : vector<1x256xf32>
    %cst_36 = arith.constant 0.000000e+00 : f32
    %86 = vector.broadcast %cst_36 : f32 to vector<1x256xf32>
    %87 = arith.select %78, %85, %86 : vector<1x256xi1>, vector<1x256xf32>
    %88 = arith.addf %51, %87 : vector<1x256xf32>
    %c2_i32 = arith.constant 2 : i32
    %c0_37 = arith.constant 0 : index
    %c0_38 = arith.constant 0 : index
    %89 = vector.load %arg10[%c0_37, %c0_38] : memref<1x256xf32, #tpu.memory_space<vmem>>, vector<1x256xf32>
    %90 = arith.addf %89, %84 : vector<1x256xf32>
    %c0_39 = arith.constant 0 : index
    %c0_40 = arith.constant 0 : index
    %91 = vector.load %arg10[%c0_39, %c0_40] : memref<1x256xf32, #tpu.memory_space<vmem>>, vector<1x256xf32>
    tpu.vector_store %arg10[%c0_39, %c0_40], %90 {strides = array<i32>} : memref<1x256xf32, #tpu.memory_space<vmem>>, vector<1x256xf32>,
    %c0_41 = arith.constant 0 : index
    %c0_42 = arith.constant 0 : index
    %92 = vector.load %arg11[%c0_41, %c0_42] : memref<1x256xf32, #tpu.memory_space<vmem>>, vector<1x256xf32>
    %93 = arith.addf %92, %88 : vector<1x256xf32>
    %c0_43 = arith.constant 0 : index
    %c0_44 = arith.constant 0 : index
    %94 = vector.load %arg11[%c0_43, %c0_44] : memref<1x256xf32, #tpu.memory_space<vmem>>, vector<1x256xf32>
    tpu.vector_store %arg11[%c0_43, %c0_44], %93 {strides = array<i32>} : memref<1x256xf32, #tpu.memory_space<vmem>>, vector<1x256xf32>,
    %c1_i32_45 = arith.constant 1 : i32
    %95 = arith.cmpi eq, %arg1, %c1_i32_45 : i32
    %96 = arith.extui %95 : i1 to i32
    %c0_i32_46 = arith.constant 0 : i32
    %97 = arith.cmpi ne, %96, %c0_i32_46 : i32
    scf.if %97 {
      %c0_47 = arith.constant 0 : index
      %c0_48 = arith.constant 0 : index
      %98 = vector.load %arg10[%c0_47, %c0_48] : memref<1x256xf32, #tpu.memory_space<vmem>>, vector<1x256xf32>
      %99 = vector.shape_cast %98 : vector<1x256xf32> to vector<1x1x256xf32>
      %cst_49 = arith.constant dense<0.000000e+00> : vector<1xf32>
      %100 = vector.multi_reduction <add>, %99, %cst_49 [1, 2] : vector<1x1x256xf32> to vector<1xf32>
      %101 = vector.shape_cast %100 : vector<1xf32> to vector<1x1x1xf32>
      %102 = vector.extract %101[0, 0, 0] : f32 from vector<1x1x1xf32>
      %103 = vector.broadcast %102 : f32 to vector<1x1xf32>
      %cst_50 = arith.constant 0.00193798449 : f32
      %104 = vector.broadcast %cst_50 : f32 to vector<1x1xf32>
      %105 = arith.mulf %103, %104 : vector<1x1xf32>
      %c0_51 = arith.constant 0 : index
      %c0_52 = arith.constant 0 : index
      %106 = vector.load %arg11[%c0_51, %c0_52] : memref<1x256xf32, #tpu.memory_space<vmem>>, vector<1x256xf32>
      %107 = vector.shape_cast %106 : vector<1x256xf32> to vector<1x1x256xf32>
      %cst_53 = arith.constant dense<0.000000e+00> : vector<1xf32>
      %108 = vector.multi_reduction <add>, %107, %cst_53 [1, 2] : vector<1x1x256xf32> to vector<1xf32>
      %109 = vector.shape_cast %108 : vector<1xf32> to vector<1x1x1xf32>
      %110 = vector.extract %109[0, 0, 0] : f32 from vector<1x1x1xf32>
      %111 = vector.broadcast %110 : f32 to vector<1x1xf32>
      %cst_54 = arith.constant 0.00193798449 : f32
      %112 = vector.broadcast %cst_54 : f32 to vector<1x1xf32>
      %113 = arith.mulf %111, %112 : vector<1x1xf32>
      %114 = tpu.iota {dimensions = array<i32: 1>} : vector<1x128xi32>
      %c0_i32_55 = arith.constant 0 : i32
      %115 = vector.broadcast %c0_i32_55 : i32 to vector<1x128xi32>
      %116 = arith.cmpi eq, %114, %115 : vector<1x128xi32>
      %cst_56 = arith.constant 0.000000e+00 : f32
      %117 = vector.shape_cast %105 : vector<1x1xf32> to vector<1x1xf32>
      %118 = vector.broadcast %117 : vector<1x1xf32> to vector<1x128xf32>
      %119 = vector.broadcast %cst_56 : f32 to vector<1x128xf32>
      %120 = arith.select %116, %118, %119 : vector<1x128xi1>, vector<1x128xf32>
      %c1_i32_57 = arith.constant 1 : i32
      %121 = vector.broadcast %c1_i32_57 : i32 to vector<1x128xi32>
      %122 = arith.cmpi eq, %114, %121 : vector<1x128xi32>
      %cst_58 = arith.constant 0.000000e+00 : f32
      %123 = vector.shape_cast %113 : vector<1x1xf32> to vector<1x1xf32>
      %124 = vector.broadcast %123 : vector<1x1xf32> to vector<1x128xf32>
      %125 = vector.broadcast %cst_58 : f32 to vector<1x128xf32>
      %126 = arith.select %122, %124, %125 : vector<1x128xi1>, vector<1x128xf32>
      %127 = arith.addf %120, %126 : vector<1x128xf32>
      %c0_59 = arith.constant 0 : index
      %c0_60 = arith.constant 0 : index
      %c0_61 = arith.constant 0 : index
      %128 = vector.load %arg9[%c0_59, %c0_60, %c0_61] : memref<1x1x128xf32, #tpu.memory_space<vmem>>, vector<1x1x128xf32>
      %129 = vector.shape_cast %128 : vector<1x1x128xf32> to vector<1x128xf32>
      %130 = vector.shape_cast %127 : vector<1x128xf32> to vector<1x1x128xf32>
      tpu.vector_store %arg9[%c0_59, %c0_60, %c0_61], %130 {strides = array<i32>} : memref<1x1x128xf32, #tpu.memory_space<vmem>>, vector<1x1x128xf32>,
    } else {
    }
    return
  }
  func.func @transform_0(%arg0: i32, %arg1: i32) -> (i32, i32, i32, i32) {
    %c0_i32 = arith.constant 0 : i32
    %c0_i32_0 = arith.constant 0 : i32
    %c0_i32_1 = arith.constant 0 : i32
    return %arg0, %arg1, %c0_i32, %c0_i32_0 : i32, i32, i32, i32
  }
  func.func @transform_1(%arg0: i32, %arg1: i32) -> (i32, i32) {
    %c0_i32 = arith.constant 0 : i32
    %c0_i32_0 = arith.constant 0 : i32
    %c0_i32_1 = arith.constant 0 : i32
    return %c0_i32, %c0_i32_0 : i32, i32
  }
  func.func @transform_2(%arg0: i32, %arg1: i32) -> (i32, i32) {
    %c0_i32 = arith.constant 0 : i32
    %c0_i32_0 = arith.constant 0 : i32
    %c0_i32_1 = arith.constant 0 : i32
    return %c0_i32, %c0_i32_0 : i32, i32
  }
  func.func @transform_3(%arg0: i32, %arg1: i32) -> (i32, i32) {
    %c0_i32 = arith.constant 0 : i32
    %c0_i32_0 = arith.constant 0 : i32
    %c0_i32_1 = arith.constant 0 : i32
    return %c0_i32, %c0_i32_0 : i32, i32
  }
  func.func @transform_4(%arg0: i32, %arg1: i32) -> (i32, i32) {
    %c0_i32 = arith.constant 0 : i32
    %c0_i32_0 = arith.constant 0 : i32
    %c0_i32_1 = arith.constant 0 : i32
    return %c0_i32, %c0_i32_0 : i32, i32
  }
  func.func @transform_5(%arg0: i32, %arg1: i32) -> (i32, i32) {
    %c0_i32 = arith.constant 0 : i32
    %c0_i32_0 = arith.constant 0 : i32
    %c0_i32_1 = arith.constant 0 : i32
    return %c0_i32, %c0_i32_0 : i32, i32
  }
  func.func @transform_6(%arg0: i32, %arg1: i32) -> (i32, i32) {
    %c0_i32 = arith.constant 0 : i32
    %c0_i32_0 = arith.constant 0 : i32
    %c0_i32_1 = arith.constant 0 : i32
    return %c0_i32, %c0_i32_0 : i32, i32
  }
  func.func @transform_7(%arg0: i32, %arg1: i32) -> (i32, i32, i32) {
    %c0_i32 = arith.constant 0 : i32
    %c0_i32_0 = arith.constant 0 : i32
    %c0_i32_1 = arith.constant 0 : i32
    return %arg0, %c0_i32, %c0_i32_0 : i32, i32, i32
  }
}

</mosaic_0001>

<llo_original>
// kernel: wave_adversarial_loss.1
$region0: #{wave_adversarial_loss.1}
  #allocation0 [shape = 'u32[]', space=smem, size = 0x4, offset = 0x4, fixed_abs, tag = 'smem constant byte address 0x4 - core index']
  #allocation1 [shape = 'u32[144,128]{1,0:T(1,128)}', space=vmem, size = 0x12000, scoped, tag = 'internal scratch']
  #allocation2 [shape = 'f32[1,256]{1,0:T(1,128)}', space=vmem, size = 0x400, scoped, tag = 'scratch operand']
  #allocation3 [shape = 'f32[1,256]{1,0:T(1,128)}', space=vmem, size = 0x400, scoped, tag = 'scratch operand']
  #allocation4 [shape = 'f32[1,1]{1,0:T(1,128)S(1)}', space=vmem, size = 0x200, scoped, tag = 'scoped memory for wave_adversarial_loss.1']
  %s0 = inlined_call_operand.vmem [shape: bf16[2,4,16,256], index: 0, kind: input, shape index: {}]
  %s1 = inlined_call_operand.vmem [shape: bf16[32,16], index: 1, kind: input, shape index: {}]
  %s2 = inlined_call_operand.vmem [shape: f32[32,1], index: 2, kind: input, shape index: {}]
  %s3 = inlined_call_operand.vmem [shape: bf16[32,32], index: 3, kind: input, shape index: {}]
  %s4 = inlined_call_operand.vmem [shape: f32[32,1], index: 4, kind: input, shape index: {}]
  %s5 = inlined_call_operand.vmem [shape: bf16[8,32], index: 5, kind: input, shape index: {}]
  %s6 = inlined_call_operand.<no memory space> [shape: f32[1,1], index: 6, kind: input, shape index: {}]
  %s7 = inlined_call_operand.vmem [shape: f32[2,1,128], index: 7, kind: output, shape index: {}]
  %s8 = sld [smem:[#allocation0]]
  $region69: #{wave_adversarial_loss.1} parent=0
    _
  %s10 = ssub.s32 1, %s8
  %s11 = scalar_select 0, %s10, %s8
  %v12 = vstv %s6
  %13 = vst [vmem:[#allocation4] sm:$0x1] %v12
  loop: start=0, step=1, limit=6
  $region2: #{wave_adversarial_loss.1} parent=0 // loop_pre_header
    _
  $region3: #{wave_adversarial_loss.1} parent=0 // loop_header
    %s15 = sphi 0, %s19
    %p16 = scmp.ge.s32.totalorder %s15, 6
    %s22 = sphi 0, %s34
    %s23 = sphi 0, %s30
    %s24 = sphi 0, %s22
    %s25 = sphi 0, %s23
    %s26 = sphi 0, %s24
    %s27 = sphi 0, %s25
    %s39 = sphi 0, %s41
    %s42 = sphi 0, %s39
    %s43 = sphi 0, %s42
    %s59 = sphi 0, %s43
    %s63 = sphi 0, %s63
    %s65 = sphi 0, %s63
    %s66 = sphi 0, %s65
    %s80 = sphi 0, %s66
    %s84 = sphi 0, %s84
    %s86 = sphi 0, %s84
    %s87 = sphi 0, %s86
    %s101 = sphi 0, %s87
    %s105 = sphi 0, %s105
    %s107 = sphi 0, %s105
    %s108 = sphi 0, %s107
    %s122 = sphi 0, %s108
    %s126 = sphi 0, %s126
    %s128 = sphi 0, %s126
    %s129 = sphi 0, %s128
    %s143 = sphi 0, %s129
    %s147 = sphi 0, %s147
    %s149 = sphi 0, %s147
    %s150 = sphi 0, %s149
    %s164 = sphi 0, %s150
    %s168 = sphi 0, %s168
    %s170 = sphi 0, %s168
    %s171 = sphi 0, %s170
    %s185 = sphi 0, %s171
    %s191 = sphi 0, %s193
    %s194 = sphi 0, %s191
    %s195 = sphi 0, %s194
    %s211 = sphi 0, %s195
  $region4: #{wave_adversarial_loss.1} parent=0 // loop_header_branch
    %18 = sbr.rel (%p16) target = $region8
  $region5: #{wave_adversarial_loss.1} parent=0 // loop_body
    %s20 = ssub.s32 %s15, 1
    %s21 = ssub.s32 %s15, 2
    %s28 = sadd.s32 1, %s23
    %p29 = scmp.ge.s32.totalorder %s28, 2
    %s30 = scalar_select %p29, 0, %s28
    %s31 = sadd.s32 1, %s22
    %s32 = scalar_select %p29, %s31, %s22
    %p33 = scmp.ge.s32.totalorder %s32, 2
    %s34 = scalar_select %p33, 0, %s32
    %s35 = ssub.s32 %s22, %s34
    %s36 = ssub.s32 %s23, %s30
    %s37 = sor.u32 %s35, %s36
    %p38 = scmp.eq.s32.totalorder %s37, 0
    %s40 = sadd.s32 %s39, 1
    %s41 = scalar_select %p38, %s39, %s40
    %p44 = pneg %p38
    %p45 = scmp.eq.s32.totalorder %s15, 3
    %p46 = por %p44, %p45
    %p47 = scmp.ne.s32.totalorder %s39, %s42
    %p48 = scmp.eq.s32.totalorder %s15, 0
    %p49 = por %p47, %p48
    %p50 = scmp.ne.s32.totalorder %s39, %s42
    %p51 = scmp.eq.s32.totalorder %s20, 3
    %p52 = por %p50, %p51
    %p53 = scmp.ne.s32.totalorder %s42, %s43
    %p54 = scmp.eq.s32.totalorder %s20, 0
    %p55 = por %p53, %p54
    %p56 = scmp.ne.s32.totalorder %s42, %s43
    %p57 = scmp.eq.s32.totalorder %s21, 3
    %p58 = por %p56, %p57
    %p60 = scmp.ne.s32.totalorder %s43, %s59
    %p61 = scmp.eq.s32.totalorder %s21, 0
    %p62 = por %p60, %p61
    %s64 = sadd.s32 %s63, 1
    %p67 = scmp.eq.s32.totalorder %s15, 3
    %p68 = scmp.ne.s32.totalorder %s63, %s65
    %p69 = scmp.eq.s32.totalorder %s15, 0
    %p70 = por %p68, %p69
    %p71 = scmp.ne.s32.totalorder %s63, %s65
    %p72 = scmp.eq.s32.totalorder %s20, 3
    %p73 = por %p71, %p72
    %p74 = scmp.ne.s32.totalorder %s65, %s66
    %p75 = scmp.eq.s32.totalorder %s20, 0
    %p76 = por %p74, %p75
    %p77 = scmp.ne.s32.totalorder %s65, %s66
    %p78 = scmp.eq.s32.totalorder %s21, 3
    %p79 = por %p77, %p78
    %p81 = scmp.ne.s32.totalorder %s66, %s80
    %p82 = scmp.eq.s32.totalorder %s21, 0
    %p83 = por %p81, %p82
    %s85 = sadd.s32 %s84, 1
    %p88 = scmp.eq.s32.totalorder %s15, 3
    %p89 = scmp.ne.s32.totalorder %s84, %s86
    %p90 = scmp.eq.s32.totalorder %s15, 0
    %p91 = por %p89, %p90
    %p92 = scmp.ne.s32.totalorder %s84, %s86
    %p93 = scmp.eq.s32.totalorder %s20, 3
    %p94 = por %p92, %p93
    %p95 = scmp.ne.s32.totalorder %s86, %s87
    %p96 = scmp.eq.s32.totalorder %s20, 0
    %p97 = por %p95, %p96
    %p98 = scmp.ne.s32.totalorder %s86, %s87
    %p99 = scmp.eq.s32.totalorder %s21, 3
    %p100 = por %p98, %p99
    %p102 = scmp.ne.s32.totalorder %s87, %s101
    %p103 = scmp.eq.s32.totalorder %s21, 0
    %p104 = por %p102, %p103
    %s106 = sadd.s32 %s105, 1
    %p109 = scmp.eq.s32.totalorder %s15, 3
    %p110 = scmp.ne.s32.totalorder %s105, %s107
    %p111 = scmp.eq.s32.totalorder %s15, 0
    %p112 = por %p110, %p111
    %p113 = scmp.ne.s32.totalorder %s105, %s107
    %p114 = scmp.eq.s32.totalorder %s20, 3
    %p115 = por %p113, %p114
    %p116 = scmp.ne.s32.totalorder %s107, %s108
    %p117 = scmp.eq.s32.totalorder %s20, 0
    %p118 = por %p116, %p117
    %p119 = scmp.ne.s32.totalorder %s107, %s108
    %p120 = scmp.eq.s32.totalorder %s21, 3
    %p121 = por %p119, %p120
    %p123 = scmp.ne.s32.totalorder %s108, %s122
    %p124 = scmp.eq.s32.totalorder %s21, 0
    %p125 = por %p123, %p124
    %s127 = sadd.s32 %s126, 1
    %p130 = scmp.eq.s32.totalorder %s15, 3
    %p131 = scmp.ne.s32.totalorder %s126, %s128
    %p132 = scmp.eq.s32.totalorder %s15, 0
    %p133 = por %p131, %p132
    %p134 = scmp.ne.s32.totalorder %s126, %s128
    %p135 = scmp.eq.s32.totalorder %s20, 3
    %p136 = por %p134, %p135
    %p137 = scmp.ne.s32.totalorder %s128, %s129
    %p138 = scmp.eq.s32.totalorder %s20, 0
    %p139 = por %p137, %p138
    %p140 = scmp.ne.s32.totalorder %s128, %s129
    %p141 = scmp.eq.s32.totalorder %s21, 3
    %p142 = por %p140, %p141
    %p144 = scmp.ne.s32.totalorder %s129, %s143
    %p145 = scmp.eq.s32.totalorder %s21, 0
    %p146 = por %p144, %p145
    %s148 = sadd.s32 %s147, 1
    %p151 = scmp.eq.s32.totalorder %s15, 3
    %p152 = scmp.ne.s32.totalorder %s147, %s149
    %p153 = scmp.eq.s32.totalorder %s15, 0
    %p154 = por %p152, %p153
    %p155 = scmp.ne.s32.totalorder %s147, %s149
    %p156 = scmp.eq.s32.totalorder %s20, 3
    %p157 = por %p155, %p156
    %p158 = scmp.ne.s32.totalorder %s149, %s150
    %p159 = scmp.eq.s32.totalorder %s20, 0
    %p160 = por %p158, %p159
    %p161 = scmp.ne.s32.totalorder %s149, %s150
    %p162 = scmp.eq.s32.totalorder %s21, 3
    %p163 = por %p161, %p162
    %p165 = scmp.ne.s32.totalorder %s150, %s164
    %p166 = scmp.eq.s32.totalorder %s21, 0
    %p167 = por %p165, %p166
    %s169 = sadd.s32 %s168, 1
    %p172 = scmp.eq.s32.totalorder %s15, 3
    %p173 = scmp.ne.s32.totalorder %s168, %s170
    %p174 = scmp.eq.s32.totalorder %s15, 0
    %p175 = por %p173, %p174
    %p176 = scmp.ne.s32.totalorder %s168, %s170
    %p177 = scmp.eq.s32.totalorder %s20, 3
    %p178 = por %p176, %p177
    %p179 = scmp.ne.s32.totalorder %s170, %s171
    %p180 = scmp.eq.s32.totalorder %s20, 0
    %p181 = por %p179, %p180
    %p182 = scmp.ne.s32.totalorder %s170, %s171
    %p183 = scmp.eq.s32.totalorder %s21, 3
    %p184 = por %p182, %p183
    %p186 = scmp.ne.s32.totalorder %s171, %s185
    %p187 = scmp.eq.s32.totalorder %s21, 0
    %p188 = por %p186, %p187
    %s189 = ssub.s32 %s22, %s34
    %p190 = scmp.eq.s32.totalorder %s189, 0
    %s192 = sadd.s32 %s191, 1
    %s193 = scalar_select %p190, %s191, %s192
    %p196 = pneg %p190
    %p197 = scmp.eq.s32.totalorder %s15, 3
    %p198 = por %p196, %p197
    %p199 = scmp.ne.s32.totalorder %s191, %s194
    %p200 = scmp.eq.s32.totalorder %s15, 0
    %p201 = por %p199, %p200
    %p202 = scmp.ne.s32.totalorder %s191, %s194
    %p203 = scmp.eq.s32.totalorder %s20, 3
    %p204 = por %p202, %p203
    %p205 = scmp.ne.s32.totalorder %s194, %s195
    %p206 = scmp.eq.s32.totalorder %s20, 0
    %p207 = por %p205, %p206
    %p208 = scmp.ne.s32.totalorder %s194, %s195
    %p209 = scmp.eq.s32.totalorder %s21, 3
    %p210 = por %p208, %p209
    %p212 = scmp.ne.s32.totalorder %s195, %s211
    %p213 = scmp.eq.s32.totalorder %s21, 0
    %p214 = por %p212, %p213
    %p215 = scmp.le.s32.totalorder 1, %s15
    %p216 = scmp.lt.s32.totalorder %s15, 5
    %p217 = pnand %p215, %p216
    %p218 = pneg %p217
    // Predicated region
    $region9: #{wave_adversarial_loss.1} parent=5 // pred_check
      _
    $region10: #{wave_adversarial_loss.1} parent=5 // pred_check_branch
      %220 = sbr.rel (%p217) target = $region12
    $region11: #{wave_adversarial_loss.1} parent=5 // pred_region
      %s221 = ssub.s32 %s15, 1
      // Predicated region
      $region13: #{wave_adversarial_loss.1} parent=11 // pred_check
        %p222 = pneg %p76
      $region14: #{wave_adversarial_loss.1} parent=11 // pred_check_branch
        %224 = sbr.rel (%p222) target = $region16
      $region15: #{wave_adversarial_loss.1} parent=11 // pred_region
        _
      $region16: #{wave_adversarial_loss.1} parent=11 // pred_fallthru
        _
      // Predicated region
      $region17: #{wave_adversarial_loss.1} parent=11 // pred_check
        %p225 = pneg %p97
      $region18: #{wave_adversarial_loss.1} parent=11 // pred_check_branch
        %227 = sbr.rel (%p225) target = $region20
      $region19: #{wave_adversarial_loss.1} parent=11 // pred_region
        _
      $region20: #{wave_adversarial_loss.1} parent=11 // pred_fallthru
        _
      // Predicated region
      $region21: #{wave_adversarial_loss.1} parent=11 // pred_check
        %p228 = pneg %p118
      $region22: #{wave_adversarial_loss.1} parent=11 // pred_check_branch
        %230 = sbr.rel (%p228) target = $region24
      $region23: #{wave_adversarial_loss.1} parent=11 // pred_region
        _
      $region24: #{wave_adversarial_loss.1} parent=11 // pred_fallthru
        _
      // Predicated region
      $region25: #{wave_adversarial_loss.1} parent=11 // pred_check
        %p231 = pneg %p139
      $region26: #{wave_adversarial_loss.1} parent=11 // pred_check_branch
        %233 = sbr.rel (%p231) target = $region28
      $region27: #{wave_adversarial_loss.1} parent=11 // pred_region
        _
      $region28: #{wave_adversarial_loss.1} parent=11 // pred_fallthru
        _
      // Predicated region
      $region29: #{wave_adversarial_loss.1} parent=11 // pred_check
        %p234 = pneg %p160
      $region30: #{wave_adversarial_loss.1} parent=11 // pred_check_branch
        %236 = sbr.rel (%p234) target = $region32
      $region31: #{wave_adversarial_loss.1} parent=11 // pred_region
        _
      $region32: #{wave_adversarial_loss.1} parent=11 // pred_fallthru
        _
      // Predicated region
      $region33: #{wave_adversarial_loss.1} parent=11 // pred_check
        %p237 = pneg %p181
      $region34: #{wave_adversarial_loss.1} parent=11 // pred_check_branch
        %239 = sbr.rel (%p237) target = $region36
      $region35: #{wave_adversarial_loss.1} parent=11 // pred_region
        _
      $region36: #{wave_adversarial_loss.1} parent=11 // pred_fallthru
        _
    $region12: #{wave_adversarial_loss.1} parent=5 // pred_fallthru
      _
    %p240 = scmp.lt.s32.totalorder %s15, 4
    // Predicated region
    $region37: #{wave_adversarial_loss.1} parent=5 // pred_check
      %p241 = pneg %p240
    $region38: #{wave_adversarial_loss.1} parent=5 // pred_check_branch
      %243 = sbr.rel (%p241) target = $region40
    $region39: #{wave_adversarial_loss.1} parent=5 // pred_region
      // Predicated region
      $region41: #{wave_adversarial_loss.1} parent=39 // pred_check
        %p244 = pneg %p49
      $region42: #{wave_adversarial_loss.1} parent=39 // pred_check_branch
        %246 = sbr.rel (%p244) target = $region44
      $region43: #{wave_adversarial_loss.1} parent=39 // pred_region
        %s247 = smul.u32 2, %s23
        %p248 = scmp.lt.s32.totalorder %s22, 1
        %s249 = scalar_select %p248, %s22, 1
        %p250 = scmp.lt.s32.totalorder %s247, 3
        %s251 = scalar_select %p250, %s247, 3
        %s252 = smul.addr %s251, 4
        %s253 = smul.addr %s249, 16
        %s254 = sadd.s32 %s252, %s253
        %s255 = smul.addr %s254, 4
        %s256 = scalar_lea.vmem %s0, %s255
        %s257 = smul.u32 2, %s23
      $region44: #{wave_adversarial_loss.1} parent=39 // pred_fallthru
        _
    $region40: #{wave_adversarial_loss.1} parent=5 // pred_fallthru
      _
    %p258 = scmp.le.s32.totalorder 1, %s15
    %p259 = scmp.lt.s32.totalorder %s15, 5
    %p260 = pnand %p258, %p259
    %p261 = pneg %p260
    // Predicated region
    $region45: #{wave_adversarial_loss.1} parent=5 // pred_check
      _
    $region46: #{wave_adversarial_loss.1} parent=5 // pred_check_branch
      %263 = sbr.rel (%p260) target = $region48
    $region47: #{wave_adversarial_loss.1} parent=5 // pred_region
      %s264 = ssub.s32 %s15, 1
      %s265 = smul.u32 2, %s25
      %p266 = scmp.lt.s32.totalorder %s24, 1
      %s267 = scalar_select %p266, %s24, 1
      %p268 = scmp.lt.s32.totalorder %s265, 3
      %s269 = scalar_select %p268, %s265, 3
      %s270 = smul.addr %s269, 4
      %s271 = smul.addr %s267, 16
      %s272 = sadd.s32 %s270, %s271
      %s273 = smul.addr %s272, 4
      %s274 = scalar_lea.vmem %s0, %s273
      %p275 = pneg %p55
      %p276 = pneg %p52
      %p277 = pneg %p76
      %p278 = pneg %p73
      %p279 = pneg %p97
      %p280 = pneg %p94
      %p281 = pneg %p118
      %p282 = pneg %p115
      %p283 = pneg %p139
      %p284 = pneg %p136
      %p285 = pneg %p160
      %p286 = pneg %p157
      %p287 = pneg %p181
      %p288 = pneg %p178
      %p289 = pneg %p207
      %p290 = pneg %p204
      %p291 = scmp.lt.s32.totalorder %s24, 1
      %s292 = scalar_select %p291, %s24, 1
      %s293 = scalar_lea.vmem %s7, %s292
      %s294 = smul.u32 2, %s25
      %p295 = scmp.lt.s32.totalorder %s24, 1
      %s296 = scalar_select %p295, %s24, 1
      %p297 = scmp.lt.s32.totalorder %s294, 3
      %s298 = scalar_select %p297, %s294, 3
      %s299 = smul.addr %s298, 4
      %s300 = smul.addr %s296, 16
      %s301 = sadd.s32 %s299, %s300
      %s302 = smul.addr %s301, 4
      %s303 = scalar_lea.vmem %s0, %s302
      %s304 = smul.u32 2, %s25
      %p305 = scmp.lt.s32.totalorder %s24, 1
      %s306 = scalar_select %p305, %s24, 1
      %s307 = scalar_lea.vmem %s7, %s306
      %p309 = scmp.eq.s32.totalorder %s25, 0
      // Predicated region
      $region49: #{wave_adversarial_loss.1} parent=47 // pred_check
        %p310 = pneg %p309
      $region50: #{wave_adversarial_loss.1} parent=47 // pred_check_branch
        %312 = sbr.rel (%p310) target = $region52
      $region51: #{wave_adversarial_loss.1} parent=47 // pred_region
        %v313 = vlaneseq
        %vm314 = vcmp.ge.s32.totalorder %v313, 0
        %vm315 = vcmp.lt.s32.totalorder %v313, 256
        %vm316 = vmand %vm314, %vm315
        %317 = vst.msk [vmem:[#allocation2] sm:$0x3] %vm316, 0.0
        %318 = vst.msk [vmem:[#allocation3] sm:$0x3] %vm316, 0.0
      $region52: #{wave_adversarial_loss.1} parent=47 // pred_fallthru
        _
      %s319 = scvt.s32.f32 %s24
      %s320 = smul.f32 %s319, 2.0
      %s321 = ssub.f32 1.0, %s320
      %v322 = vld [vmem:[%s1] sm:$0xf]
      %v323 = vld [vmem:[%s1 + $0x4] sm:$0xf]
      %v324 = vld [vmem:[%s1 + $0x8] sm:$0xf]
      %v325 = vld [vmem:[%s1 + $0xc] sm:$0xf]
      %v326 = vld [vmem:[%s3] sm:$0xf]
      %v327 = vld [vmem:[%s3 + $0x4] sm:$0xf]
      %v328 = vld [vmem:[%s3 + $0x8] sm:$0xf]
      %v329 = vld [vmem:[%s3 + $0xc] sm:$0xf]
      %v330 = vld [vmem:[%s5] sm:$0xf]
      %v331 = vld [vmem:[%s2] sm:$0xff]
      %v332 = vld [vmem:[%s2 + $0x8] sm:$0xff]
      %v333 = vld [vmem:[%s2 + $0x10] sm:$0xff]
      %v334 = vld [vmem:[%s2 + $0x18] sm:$0xff]
      %v335 = vld [vmem:[%s4] sm:$0xff]
      %v336 = vld [vmem:[%s4 + $0x8] sm:$0xff]
      %v337 = vld [vmem:[%s4 + $0x10] sm:$0xff]
      %v338 = vld [vmem:[%s4 + $0x18] sm:$0xff]
      %v339 = vld [vmem:[#allocation4] sm:$0x1]
      %v340 = vlaneseq
      %v341 = vand.u32 %v340, 127
      %v342 = vadd.s32 %v341, 128
      %s343 = smul.u32 %s25, 512
      %v344 = vld [vmem:[%s303] sm:$0xff]
      %v345 = vld [vmem:[%s303 + $0x8] sm:$0xff]
      %347 = vset.pattern.permute.xlu0 0
      %348 = vperm.xlu0 %347, %v331
      %v349 = vpop.permute.xlu0 %348
      %352 = vset.pattern.permute.xlu0 0
      %353 = vperm.xlu0 %352, %v332
      %v354 = vpop.permute.xlu0 %353
      %357 = vset.pattern.permute.xlu0 0
      %358 = vperm.xlu0 %357, %v333
      %v359 = vpop.permute.xlu0 %358
      %362 = vset.pattern.permute.xlu0 0
      %363 = vperm.xlu0 %362, %v334
      %v364 = vpop.permute.xlu0 %363
      %v370 = vunpack.c.l.b16 %v322
      %v371 = vunpack.c.l.b16 %v323
      %v372 = vunpack.c.l.b16 %v324
      %v373 = vunpack.c.l.b16 %v325
      %v374 = vpack.c.b16 %v371, %v370
      %v375 = vpack.c.b16 %v373, %v372
      %v378 = vunpack.c.l.b16 %v344
      %v379 = vunpack.c.h.b16 %v344
      %v380 = vunpack.c.l.b16 %v345
      %v381 = vunpack.c.h.b16 %v345
      %v382 = vpack.c.b16 %v380, %v378
      %v383 = vpack.c.b16 %v381, %v379
      %vm386 = vcmask 130048
      %v388 = vsel %vm386, %v374, 0
      %v391 = vsel %vm386, %v375, 0
      %393 = vmatprep.subr.bf16.mxu0 %v383
      %394 = vmatpush1.bf16.msra.mxu0 %v382
      %395 = vmatprep.subr.bf16.mxu0 0
      %396 = vmatpush1.bf16.msra.mxu0 0
      %397 = vmatprep.subr.bf16.mxu0 0
      %398 = vmatpush1.bf16.msra.mxu0 0
      %399 = vmatprep.subr.bf16.mxu0 0
      %400 = vmatpush1.bf16.msra.mxu0 0
      %401 = vmatprep.subr.bf16.mxu0 0
      %402 = vmatpush1.bf16.msra.mxu0 0
      %403 = vmatprep.subr.bf16.mxu0 0
      %404 = vmatpush1.bf16.msra.mxu0 0
      %405 = vmatprep.subr.bf16.mxu0 0
      %406 = vmatpush1.bf16.msra.mxu0 0
      %407 = vmatprep.subr.bf16.mxu0 0
      %408 = vmatpush1.bf16.msra.mxu0 0
      %409 = vmatprep.subr.bf16.mxu0 0
      %410 = vmatpush1.bf16.msra.mxu0 0
      %411 = vmatprep.subr.bf16.mxu0 0
      %412 = vmatpush1.bf16.msra.mxu0 0
      %413 = vmatprep.subr.bf16.mxu0 0
      %414 = vmatpush1.bf16.msra.mxu0 0
      %415 = vmatprep.subr.bf16.mxu0 0
      %416 = vmatpush1.bf16.msra.mxu0 0
      %417 = vmatprep.subr.bf16.mxu0 0
      %418 = vmatpush1.bf16.msra.mxu0 0
      %419 = vmatprep.subr.bf16.mxu0 0
      %420 = vmatpush1.bf16.msra.mxu0 0
      %421 = vmatprep.subr.bf16.mxu0 0
      %422 = vmatpush1.bf16.msra.mxu0 0
      %423 = vmatprep.subr.bf16.mxu0 0
      %424 = vmatpush1.bf16.msra.mxu0 0
      %425 = vmatprep.mubr.bf16.mxu0 0
      %426 = vmatmul.mubr.bf16.gmra.mrb[0].mxu0 %v388
      %v427 = vpop.f32.mrb[0].mxu0
      %v428 = vadd.f32 %v349, %v427
      %v429 = vpop.f32.mrb[0].mxu0
      %v430 = vadd.f32 %v349, %v429
      %v431 = vpop.f32.mrb[0].mxu0
      %v432 = vadd.f32 %v354, %v431
      %v433 = vpop.f32.mrb[0].mxu0
      %v434 = vadd.f32 %v354, %v433
      %435 = vmatprep.mubr.bf16.mxu0 0
      %436 = vmatmul.mubr.bf16.gmra.mrb[0].mxu0 %v391
      %v437 = vpop.f32.mrb[0].mxu0
      %v438 = vadd.f32 %v359, %v437
      %v439 = vpop.f32.mrb[0].mxu0
      %v440 = vadd.f32 %v359, %v439
      %v441 = vpop.f32.mrb[0].mxu0
      %v442 = vadd.f32 %v364, %v441
      %v443 = vpop.f32.mrb[0].mxu0
      %v444 = vadd.f32 %v364, %v443
      %445 = vdwg.mxu0
      %v446 = vmul.f32 %v428, 0.3
      %v447 = vmul.f32 %v430, 0.3
      %v448 = vmul.f32 %v432, 0.3
      %v449 = vmul.f32 %v434, 0.3
      %v450 = vmul.f32 %v438, 0.3
      %v451 = vmul.f32 %v440, 0.3
      %v452 = vmul.f32 %v442, 0.3
      %v453 = vmul.f32 %v444, 0.3
      %v454 = vmax.f32 %v428, %v446
      %v455 = vmax.f32 %v430, %v447
      %v456 = vmax.f32 %v432, %v448
      %v457 = vmax.f32 %v434, %v449
      %v458 = vmax.f32 %v438, %v450
      %v459 = vmax.f32 %v440, %v451
      %v460 = vmax.f32 %v442, %v452
      %v461 = vmax.f32 %v444, %v453
      %v462 = vpack.c.bf16 %v456, %v454
      %v463 = vpack.c.bf16 %v457, %v455
      %v464 = vpack.c.bf16 %v460, %v458
      %v465 = vpack.c.bf16 %v461, %v459
      %467 = vset.pattern.permute.xlu0 0
      %468 = vperm.xlu0 %467, %v335
      %v469 = vpop.permute.xlu0 %468
      %472 = vset.pattern.permute.xlu0 0
      %473 = vperm.xlu0 %472, %v336
      %v474 = vpop.permute.xlu0 %473
      %477 = vset.pattern.permute.xlu0 0
      %478 = vperm.xlu0 %477, %v337
      %v479 = vpop.permute.xlu0 %478
      %482 = vset.pattern.permute.xlu0 0
      %483 = vperm.xlu0 %482, %v338
      %v484 = vpop.permute.xlu0 %483
      %v490 = vunpack.c.l.b16 %v326
      %v491 = vunpack.c.l.b16 %v327
      %v492 = vunpack.c.l.b16 %v328
      %v493 = vunpack.c.l.b16 %v329
      %v494 = vpack.c.b16 %v491, %v490
      %v495 = vpack.c.b16 %v493, %v492
      %vm496 = vcmask 261120
      %v498 = vsel %vm496, %v494, 0
      %v501 = vsel %vm496, %v495, 0
      %503 = vmatprep.subr.bf16.mxu0 %v463
      %504 = vmatpush1.bf16.msra.mxu0 %v462
      %505 = vmatprep.subr.bf16.mxu0 %v465
      %506 = vmatpush1.bf16.msra.mxu0 %v464
      %507 = vmatprep.subr.bf16.mxu0 0
      %508 = vmatpush1.bf16.msra.mxu0 0
      %509 = vmatprep.subr.bf16.mxu0 0
      %510 = vmatpush1.bf16.msra.mxu0 0
      %511 = vmatprep.subr.bf16.mxu0 0
      %512 = vmatpush1.bf16.msra.mxu0 0
      %513 = vmatprep.subr.bf16.mxu0 0
      %514 = vmatpush1.bf16.msra.mxu0 0
      %515 = vmatprep.subr.bf16.mxu0 0
      %516 = vmatpush1.bf16.msra.mxu0 0
      %517 = vmatprep.subr.bf16.mxu0 0
      %518 = vmatpush1.bf16.msra.mxu0 0
      %519 = vmatprep.subr.bf16.mxu0 0
      %520 = vmatpush1.bf16.msra.mxu0 0
      %521 = vmatprep.subr.bf16.mxu0 0
      %522 = vmatpush1.bf16.msra.mxu0 0
      %523 = vmatprep.subr.bf16.mxu0 0
      %524 = vmatpush1.bf16.msra.mxu0 0
      %525 = vmatprep.subr.bf16.mxu0 0
      %526 = vmatpush1.bf16.msra.mxu0 0
      %527 = vmatprep.subr.bf16.mxu0 0
      %528 = vmatpush1.bf16.msra.mxu0 0
      %529 = vmatprep.subr.bf16.mxu0 0
      %530 = vmatpush1.bf16.msra.mxu0 0
      %531 = vmatprep.subr.bf16.mxu0 0
      %532 = vmatpush1.bf16.msra.mxu0 0
      %533 = vmatprep.subr.bf16.mxu0 0
      %534 = vmatpush1.bf16.msra.mxu0 0
      %535 = vmatprep.mubr.bf16.mxu0 0
      %536 = vmatmul.mubr.bf16.gmra.mrb[0].mxu0 %v498
      %v537 = vpop.f32.mrb[0].mxu0
      %v538 = vadd.f32 %v469, %v537
      %v539 = vpop.f32.mrb[0].mxu0
      %v540 = vadd.f32 %v469, %v539
      %v541 = vpop.f32.mrb[0].mxu0
      %v542 = vadd.f32 %v474, %v541
      %v543 = vpop.f32.mrb[0].mxu0
      %v544 = vadd.f32 %v474, %v543
      %545 = vmatprep.mubr.bf16.mxu0 0
      %546 = vmatmul.mubr.bf16.gmra.mrb[0].mxu0 %v501
      %v547 = vpop.f32.mrb[0].mxu0
      %v548 = vadd.f32 %v479, %v547
      %v549 = vpop.f32.mrb[0].mxu0
      %v550 = vadd.f32 %v479, %v549
      %v551 = vpop.f32.mrb[0].mxu0
      %v552 = vadd.f32 %v484, %v551
      %v553 = vpop.f32.mrb[0].mxu0
      %v554 = vadd.f32 %v484, %v553
      %555 = vdwg.mxu0
      %v556 = vmul.f32 %v538, 0.3
      %v557 = vmul.f32 %v540, 0.3
      %v558 = vmul.f32 %v542, 0.3
      %v559 = vmul.f32 %v544, 0.3
      %v560 = vmul.f32 %v548, 0.3
      %v561 = vmul.f32 %v550, 0.3
      %v562 = vmul.f32 %v552, 0.3
      %v563 = vmul.f32 %v554, 0.3
      %v564 = vmax.f32 %v538, %v556
      %v565 = vmax.f32 %v540, %v557
      %v566 = vmax.f32 %v542, %v558
      %v567 = vmax.f32 %v544, %v559
      %v568 = vmax.f32 %v548, %v560
      %v569 = vmax.f32 %v550, %v561
      %v570 = vmax.f32 %v552, %v562
      %v571 = vmax.f32 %v554, %v563
      %v572 = vpack.c.bf16 %v566, %v564
      %v573 = vpack.c.bf16 %v567, %v565
      %v574 = vpack.c.bf16 %v570, %v568
      %v575 = vpack.c.bf16 %v571, %v569
      %v577 = vsel %vm496, %v330, 0
      %579 = vmatprep.subr.bf16.mxu0 %v573
      %580 = vmatpush1.bf16.msra.mxu0 %v572
      %581 = vmatprep.subr.bf16.mxu0 %v575
      %582 = vmatpush1.bf16.msra.mxu0 %v574
      %583 = vmatprep.subr.bf16.mxu0 0
      %584 = vmatpush1.bf16.msra.mxu0 0
      %585 = vmatprep.subr.bf16.mxu0 0
      %586 = vmatpush1.bf16.msra.mxu0 0
      %587 = vmatprep.subr.bf16.mxu0 0
      %588 = vmatpush1.bf16.msra.mxu0 0
      %589 = vmatprep.subr.bf16.mxu0 0
      %590 = vmatpush1.bf16.msra.mxu0 0
      %591 = vmatprep.subr.bf16.mxu0 0
      %592 = vmatpush1.bf16.msra.mxu0 0
      %593 = vmatprep.subr.bf16.mxu0 0
      %594 = vmatpush1.bf16.msra.mxu0 0
      %595 = vmatprep.subr.bf16.mxu0 0
      %596 = vmatpush1.bf16.msra.mxu0 0
      %597 = vmatprep.subr.bf16.mxu0 0
      %598 = vmatpush1.bf16.msra.mxu0 0
      %599 = vmatprep.subr.bf16.mxu0 0
      %600 = vmatpush1.bf16.msra.mxu0 0
      %601 = vmatprep.subr.bf16.mxu0 0
      %602 = vmatpush1.bf16.msra.mxu0 0
      %603 = vmatprep.subr.bf16.mxu0 0
      %604 = vmatpush1.bf16.msra.mxu0 0
      %605 = vmatprep.subr.bf16.mxu0 0
      %606 = vmatpush1.bf16.msra.mxu0 0
      %607 = vmatprep.subr.bf16.mxu0 0
      %608 = vmatpush1.bf16.msra.mxu0 0
      %609 = vmatprep.subr.bf16.mxu0 0
      %610 = vmatpush1.bf16.msra.mxu0 0
      %611 = vmatprep.mubr.bf16.mxu0 0
      %612 = vmatmul.mubr.bf16.gmra.mrb[0].mxu0 %v577
      %v613 = vpop.f32.mrb[0].mxu0
      %v614 = vadd.f32 0.0, %v613
      %v615 = vpop.f32.mrb[0].mxu0
      %v616 = vadd.f32 0.0, %v615
      %v617 = vpop.f32.mrb[0].mxu0
      %v618 = vpop.f32.mrb[0].mxu0
      %619 = vdwg.mxu0
      %621 = vset.pattern.permute.xlu0 0
      %622 = vperm.xlu0 %621, %v339
      %v623 = vpop.permute.xlu0 %622
      %v625 = vlaneseq
      %v626 = vshrl.u32 %v625, 7
      %v627 = vsub.s32 0, %v626
      %v628 = vrot.slane %v623, %v627
      %v629 = vadd.f32 %v614, %v628
      %v630 = vadd.f32 %v616, %v628
      %v631 = vstv %s343
      %v632 = vadd.s32 %v631, %v341
      %v633 = vadd.s32 %v631, %v342
      %vm634 = vcmp.lt.s32.totalorder %v632, 516
      %vm635 = vcmp.lt.s32.totalorder %v633, 516
      %v636 = vstv %s321
      %v637 = vsub.f32 %v629, %v636
      %v638 = vsub.f32 %v630, %v636
      %v639 = vmul.f32 %v637, %v637
      %v640 = vmul.f32 %v638, %v638
      %v641 = vsel %vm634, %v639, 0.0
      %v642 = vsel %vm635, %v640, 0.0
      %v643 = vadd.f32 %v641, 0.0
      %v644 = vadd.f32 %v642, 0.0
      %v645 = vmul.f32 %v629, %v629
      %v646 = vmul.f32 %v630, %v630
      %v647 = vsel %vm634, %v645, 0.0
      %v648 = vsel %vm635, %v646, 0.0
      %v649 = vadd.f32 %v647, 0.0
      %v650 = vadd.f32 %v648, 0.0
      %s651 = scalar_lea.vmem %s303, 16
      %v652 = vld [vmem:[%s651] sm:$0xff]
      %v653 = vld [vmem:[%s651 + $0x8] sm:$0xff]
      %v656 = vunpack.c.l.b16 %v652
      %v657 = vunpack.c.h.b16 %v652
      %v658 = vunpack.c.l.b16 %v653
      %v659 = vunpack.c.h.b16 %v653
      %v660 = vpack.c.b16 %v658, %v656
      %v661 = vpack.c.b16 %v659, %v657
      %664 = vmatprep.subr.bf16.mxu0 %v661
      %665 = vmatpush1.bf16.msra.mxu0 %v660
      %666 = vmatprep.subr.bf16.mxu0 0
      %667 = vmatpush1.bf16.msra.mxu0 0
      %668 = vmatprep.subr.bf16.mxu0 0
      %669 = vmatpush1.bf16.msra.mxu0 0
      %670 = vmatprep.subr.bf16.mxu0 0
      %671 = vmatpush1.bf16.msra.mxu0 0
      %672 = vmatprep.subr.bf16.mxu0 0
      %673 = vmatpush1.bf16.msra.mxu0 0
      %674 = vmatprep.subr.bf16.mxu0 0
      %675 = vmatpush1.bf16.msra.mxu0 0
      %676 = vmatprep.subr.bf16.mxu0 0
      %677 = vmatpush1.bf16.msra.mxu0 0
      %678 = vmatprep.subr.bf16.mxu0 0
      %679 = vmatpush1.bf16.msra.mxu0 0
      %680 = vmatprep.subr.bf16.mxu0 0
      %681 = vmatpush1.bf16.msra.mxu0 0
      %682 = vmatprep.subr.bf16.mxu0 0
      %683 = vmatpush1.bf16.msra.mxu0 0
      %684 = vmatprep.subr.bf16.mxu0 0
      %685 = vmatpush1.bf16.msra.mxu0 0
      %686 = vmatprep.subr.bf16.mxu0 0
      %687 = vmatpush1.bf16.msra.mxu0 0
      %688 = vmatprep.subr.bf16.mxu0 0
      %689 = vmatpush1.bf16.msra.mxu0 0
      %690 = vmatprep.subr.bf16.mxu0 0
      %691 = vmatpush1.bf16.msra.mxu0 0
      %692 = vmatprep.subr.bf16.mxu0 0
      %693 = vmatpush1.bf16.msra.mxu0 0
      %694 = vmatprep.subr.bf16.mxu0 0
      %695 = vmatpush1.bf16.msra.mxu0 0
      %696 = vmatprep.mubr.bf16.mxu0 0
      %697 = vmatmul.mubr.bf16.gmra.mrb[0].mxu0 %v388
      %v698 = vpop.f32.mrb[0].mxu0
      %v699 = vadd.f32 %v349, %v698
      %v700 = vpop.f32.mrb[0].mxu0
      %v701 = vadd.f32 %v349, %v700
      %v702 = vpop.f32.mrb[0].mxu0
      %v703 = vadd.f32 %v354, %v702
      %v704 = vpop.f32.mrb[0].mxu0
      %v705 = vadd.f32 %v354, %v704
      %706 = vmatprep.mubr.bf16.mxu0 0
      %707 = vmatmul.mubr.bf16.gmra.mrb[0].mxu0 %v391
      %v708 = vpop.f32.mrb[0].mxu0
      %v709 = vadd.f32 %v359, %v708
      %v710 = vpop.f32.mrb[0].mxu0
      %v711 = vadd.f32 %v359, %v710
      %v712 = vpop.f32.mrb[0].mxu0
      %v713 = vadd.f32 %v364, %v712
      %v714 = vpop.f32.mrb[0].mxu0
      %v715 = vadd.f32 %v364, %v714
      %716 = vdwg.mxu0
      %v717 = vmul.f32 %v699, 0.3
      %v718 = vmul.f32 %v701, 0.3
      %v719 = vmul.f32 %v703, 0.3
      %v720 = vmul.f32 %v705, 0.3
      %v721 = vmul.f32 %v709, 0.3
      %v722 = vmul.f32 %v711, 0.3
      %v723 = vmul.f32 %v713, 0.3
      %v724 = vmul.f32 %v715, 0.3
      %v725 = vmax.f32 %v699, %v717
      %v726 = vmax.f32 %v701, %v718
      %v727 = vmax.f32 %v703, %v719
      %v728 = vmax.f32 %v705, %v720
      %v729 = vmax.f32 %v709, %v721
      %v730 = vmax.f32 %v711, %v722
      %v731 = vmax.f32 %v713, %v723
      %v732 = vmax.f32 %v715, %v724
      %v733 = vpack.c.bf16 %v727, %v725
      %v734 = vpack.c.bf16 %v728, %v726
      %v735 = vpack.c.bf16 %v731, %v729
      %v736 = vpack.c.bf16 %v732, %v730
      %737 = vmatprep.subr.bf16.mxu0 %v734
      %738 = vmatpush1.bf16.msra.mxu0 %v733
      %739 = vmatprep.subr.bf16.mxu0 %v736
      %740 = vmatpush1.bf16.msra.mxu0 %v735
      %741 = vmatprep.subr.bf16.mxu0 0
      %742 = vmatpush1.bf16.msra.mxu0 0
      %743 = vmatprep.subr.bf16.mxu0 0
      %744 = vmatpush1.bf16.msra.mxu0 0
      %745 = vmatprep.subr.bf16.mxu0 0
      %746 = vmatpush1.bf16.msra.mxu0 0
      %747 = vmatprep.subr.bf16.mxu0 0
      %748 = vmatpush1.bf16.msra.mxu0 0
      %749 = vmatprep.subr.bf16.mxu0 0
      %750 = vmatpush1.bf16.msra.mxu0 0
      %751 = vmatprep.subr.bf16.mxu0 0
      %752 = vmatpush1.bf16.msra.mxu0 0
      %753 = vmatprep.subr.bf16.mxu0 0
      %754 = vmatpush1.bf16.msra.mxu0 0
      %755 = vmatprep.subr.bf16.mxu0 0
      %756 = vmatpush1.bf16.msra.mxu0 0
      %757 = vmatprep.subr.bf16.mxu0 0
      %758 = vmatpush1.bf16.msra.mxu0 0
      %759 = vmatprep.subr.bf16.mxu0 0
      %760 = vmatpush1.bf16.msra.mxu0 0
      %761 = vmatprep.subr.bf16.mxu0 0
      %762 = vmatpush1.bf16.msra.mxu0 0
      %763 = vmatprep.subr.bf16.mxu0 0
      %764 = vmatpush1.bf16.msra.mxu0 0
      %765 = vmatprep.subr.bf16.mxu0 0
      %766 = vmatpush1.bf16.msra.mxu0 0
      %767 = vmatprep.subr.bf16.mxu0 0
      %768 = vmatpush1.bf16.msra.mxu0 0
      %769 = vmatprep.mubr.bf16.mxu0 0
      %770 = vmatmul.mubr.bf16.gmra.mrb[0].mxu0 %v498
      %v771 = vpop.f32.mrb[0].mxu0
      %v772 = vadd.f32 %v469, %v771
      %v773 = vpop.f32.mrb[0].mxu0
      %v774 = vadd.f32 %v469, %v773
      %v775 = vpop.f32.mrb[0].mxu0
      %v776 = vadd.f32 %v474, %v775
      %v777 = vpop.f32.mrb[0].mxu0
      %v778 = vadd.f32 %v474, %v777
      %779 = vmatprep.mubr.bf16.mxu0 0
      %780 = vmatmul.mubr.bf16.gmra.mrb[0].mxu0 %v501
      %v781 = vpop.f32.mrb[0].mxu0
      %v782 = vadd.f32 %v479, %v781
      %v783 = vpop.f32.mrb[0].mxu0
      %v784 = vadd.f32 %v479, %v783
      %v785 = vpop.f32.mrb[0].mxu0
      %v786 = vadd.f32 %v484, %v785
      %v787 = vpop.f32.mrb[0].mxu0
      %v788 = vadd.f32 %v484, %v787
      %789 = vdwg.mxu0
      %v790 = vmul.f32 %v772, 0.3
      %v791 = vmul.f32 %v774, 0.3
      %v792 = vmul.f32 %v776, 0.3
      %v793 = vmul.f32 %v778, 0.3
      %v794 = vmul.f32 %v782, 0.3
      %v795 = vmul.f32 %v784, 0.3
      %v796 = vmul.f32 %v786, 0.3
      %v797 = vmul.f32 %v788, 0.3
      %v798 = vmax.f32 %v772, %v790
      %v799 = vmax.f32 %v774, %v791
      %v800 = vmax.f32 %v776, %v792
      %v801 = vmax.f32 %v778, %v793
      %v802 = vmax.f32 %v782, %v794
      %v803 = vmax.f32 %v784, %v795
      %v804 = vmax.f32 %v786, %v796
      %v805 = vmax.f32 %v788, %v797
      %v806 = vpack.c.bf16 %v800, %v798
      %v807 = vpack.c.bf16 %v801, %v799
      %v808 = vpack.c.bf16 %v804, %v802
      %v809 = vpack.c.bf16 %v805, %v803
      %810 = vmatprep.subr.bf16.mxu0 %v807
      %811 = vmatpush1.bf16.msra.mxu0 %v806
      %812 = vmatprep.subr.bf16.mxu0 %v809
      %813 = vmatpush1.bf16.msra.mxu0 %v808
      %814 = vmatprep.subr.bf16.mxu0 0
      %815 = vmatpush1.bf16.msra.mxu0 0
      %816 = vmatprep.subr.bf16.mxu0 0
      %817 = vmatpush1.bf16.msra.mxu0 0
      %818 = vmatprep.subr.bf16.mxu0 0
      %819 = vmatpush1.bf16.msra.mxu0 0
      %820 = vmatprep.subr.bf16.mxu0 0
      %821 = vmatpush1.bf16.msra.mxu0 0
      %822 = vmatprep.subr.bf16.mxu0 0
      %823 = vmatpush1.bf16.msra.mxu0 0
      %824 = vmatprep.subr.bf16.mxu0 0
      %825 = vmatpush1.bf16.msra.mxu0 0
      %826 = vmatprep.subr.bf16.mxu0 0
      %827 = vmatpush1.bf16.msra.mxu0 0
      %828 = vmatprep.subr.bf16.mxu0 0
      %829 = vmatpush1.bf16.msra.mxu0 0
      %830 = vmatprep.subr.bf16.mxu0 0
      %831 = vmatpush1.bf16.msra.mxu0 0
      %832 = vmatprep.subr.bf16.mxu0 0
      %833 = vmatpush1.bf16.msra.mxu0 0
      %834 = vmatprep.subr.bf16.mxu0 0
      %835 = vmatpush1.bf16.msra.mxu0 0
      %836 = vmatprep.subr.bf16.mxu0 0
      %837 = vmatpush1.bf16.msra.mxu0 0
      %838 = vmatprep.subr.bf16.mxu0 0
      %839 = vmatpush1.bf16.msra.mxu0 0
      %840 = vmatprep.subr.bf16.mxu0 0
      %841 = vmatpush1.bf16.msra.mxu0 0
      %842 = vmatprep.mubr.bf16.mxu0 0
      %843 = vmatmul.mubr.bf16.gmra.mrb[0].mxu0 %v577
      %v844 = vpop.f32.mrb[0].mxu0
      %v845 = vadd.f32 0.0, %v844
      %v846 = vpop.f32.mrb[0].mxu0
      %v847 = vadd.f32 0.0, %v846
      %v848 = vpop.f32.mrb[0].mxu0
      %v849 = vpop.f32.mrb[0].mxu0
      %850 = vdwg.mxu0
      %v851 = vadd.f32 %v845, %v628
      %v852 = vadd.f32 %v847, %v628
      %s853 = sadd.s32 %s343, 256
      %v854 = vstv %s853
      %v855 = vadd.s32 %v854, %v341
      %v856 = vadd.s32 %v854, %v342
      %vm857 = vcmp.lt.s32.totalorder %v855, 516
      %vm858 = vcmp.lt.s32.totalorder %v856, 516
      %v859 = vsub.f32 %v851, %v636
      %v860 = vsub.f32 %v852, %v636
      %v861 = vmul.f32 %v859, %v859
      %v862 = vmul.f32 %v860, %v860
      %v863 = vsel %vm857, %v861, 0.0
      %v864 = vsel %vm858, %v862, 0.0
      %v865 = vadd.f32 %v643, %v863
      %v866 = vadd.f32 %v644, %v864
      %v867 = vmul.f32 %v851, %v851
      %v868 = vmul.f32 %v852, %v852
      %v869 = vsel %vm857, %v867, 0.0
      %v870 = vsel %vm858, %v868, 0.0
      %v871 = vadd.f32 %v649, %v869
      %v872 = vadd.f32 %v650, %v870
      %v873 = vld [vmem:[#allocation2] sm:$0x3]
      %v876 = vcombine.low %v865, %v866
      %v878 = vunpack.c.l.s4 1966171168
      %v879 = vunpack.c.0.s8 %v878
      %v880 = vlaneseq
      %v881 = vshrl.u32 %v880, 7
      %v882 = vsub.s32 %v879, %v881
      %v883 = vrot.slane %v876, %v882
      %v885 = vunpack.c.l.s4 1966171168
      %v886 = vunpack.c.0.s8 %v885
      %v887 = vlaneseq
      %v888 = vshrl.u32 %v887, 7
      %v889 = vsub.s32 %v886, %v888
      %v890 = vrot.slane %v883, %v889
      %v892 = vadd.f32 %v873, %v890
      %v893 = vlaneseq
      %vm894 = vcmp.ge.s32.totalorder %v893, 0
      %vm895 = vcmp.lt.s32.totalorder %v893, 256
      %vm896 = vmand %vm894, %vm895
      %897 = vst.msk [vmem:[#allocation2] sm:$0x3] %vm896, %v892
      %v898 = vld [vmem:[#allocation3] sm:$0x3]
      %v901 = vcombine.low %v871, %v872
      %v903 = vunpack.c.l.s4 1966171168
      %v904 = vunpack.c.0.s8 %v903
      %v905 = vlaneseq
      %v906 = vshrl.u32 %v905, 7
      %v907 = vsub.s32 %v904, %v906
      %v908 = vrot.slane %v901, %v907
      %v910 = vunpack.c.l.s4 1966171168
      %v911 = vunpack.c.0.s8 %v910
      %v912 = vlaneseq
      %v913 = vshrl.u32 %v912, 7
      %v914 = vsub.s32 %v911, %v913
      %v915 = vrot.slane %v908, %v914
      %v917 = vadd.f32 %v898, %v915
      %918 = vst.msk [vmem:[#allocation3] sm:$0x3] %vm896, %v917
      %p919 = scmp.eq.s32.totalorder %s25, 1
      // Predicated region
      $region53: #{wave_adversarial_loss.1} parent=47 // pred_check
        %p920 = pneg %p919
      $region54: #{wave_adversarial_loss.1} parent=47 // pred_check_branch
        %922 = sbr.rel (%p920) target = $region56
      $region55: #{wave_adversarial_loss.1} parent=47 // pred_region
        %v923 = vld [vmem:[#allocation2] sm:$0x3]
        %v925 = vlaneseq
        %v926 = vshrl.u32 %v925, 7
        %v927 = vsub.s32 0, %v926
        %v928 = vrot.slane %v923, %v927
        %v929 = vlaneseq
        %v930 = vshrl.u32 %v929, 7
        %v931 = vsub.s32 1, %v930
        %v932 = vrot.slane %v923, %v931
        %vm935 = vcmask 1040384
        %v936 = vsel %vm935, %v928, 0.0
        %v937 = vsel %vm935, %v932, 0.0
        %v938 = vadd.f32 %v936, %v937
        %939 = vadd.xlane.f32.xlu0 %v938
        %v940 = vpop.xlane.xlu0 %939
        %v941 = vrot.slane %v940, 4
        %v942 = vadd.f32 %v940, %v941
        %v943 = vrot.slane %v942, 2
        %v944 = vadd.f32 %v942, %v943
        %v945 = vrot.slane %v944, 1
        %v946 = vadd.f32 %v944, %v945
        %s947 = vtos %v946
        %v948 = vstv %s947
        %v949 = vmul.f32 %v948, 0.0019379845
        %v950 = vld [vmem:[#allocation3] sm:$0x3]
        %v952 = vlaneseq
        %v953 = vshrl.u32 %v952, 7
        %v954 = vsub.s32 0, %v953
        %v955 = vrot.slane %v950, %v954
        %v956 = vlaneseq
        %v957 = vshrl.u32 %v956, 7
        %v958 = vsub.s32 1, %v957
        %v959 = vrot.slane %v950, %v958
        %v962 = vsel %vm935, %v955, 0.0
        %v963 = vsel %vm935, %v959, 0.0
        %v964 = vadd.f32 %v962, %v963
        %965 = vadd.xlane.f32.xlu0 %v964
        %v966 = vpop.xlane.xlu0 %965
        %v967 = vrot.slane %v966, 4
        %v968 = vadd.f32 %v966, %v967
        %v969 = vrot.slane %v968, 2
        %v970 = vadd.f32 %v968, %v969
        %v971 = vrot.slane %v970, 1
        %v972 = vadd.f32 %v970, %v971
        %s973 = vtos %v972
        %v974 = vstv %s973
        %v975 = vmul.f32 %v974, 0.0019379845
        %vm976 = vcmp.eq.s32.totalorder %v341, 0
        %v977 = vsel %vm976, %v949, 0.0
        %vm978 = vcmp.eq.s32.totalorder %v341, 1
        %v979 = vsel %vm978, %v975, 0.0
        %v980 = vadd.f32 %v977, %v979
        %981 = vst [vmem:[%s307] sm:$0x1] %v980
      $region56: #{wave_adversarial_loss.1} parent=47 // pred_fallthru
        _
      %p982 = scmp.lt.s32.totalorder %s24, 1
      %s983 = scalar_select %p982, %s24, 1
      %s984 = scalar_lea.vmem %s7, %s983
      // Predicated region
      $region57: #{wave_adversarial_loss.1} parent=47 // pred_check
        %p985 = pneg %p204
      $region58: #{wave_adversarial_loss.1} parent=47 // pred_check_branch
        %987 = sbr.rel (%p985) target = $region60
      $region59: #{wave_adversarial_loss.1} parent=47 // pred_region
        _
      $region60: #{wave_adversarial_loss.1} parent=47 // pred_fallthru
        _
    $region48: #{wave_adversarial_loss.1} parent=5 // pred_fallthru
      _
    %p988 = scmp.le.s32.totalorder 2, %s15
    // Predicated region
    $region61: #{wave_adversarial_loss.1} parent=5 // pred_check
      %p989 = pneg %p988
    $region62: #{wave_adversarial_loss.1} parent=5 // pred_check_branch
      %991 = sbr.rel (%p989) target = $region64
    $region63: #{wave_adversarial_loss.1} parent=5 // pred_region
      %s992 = ssub.s32 %s15, 2
      // Predicated region
      $region65: #{wave_adversarial_loss.1} parent=63 // pred_check
        %p993 = pneg %p210
      $region66: #{wave_adversarial_loss.1} parent=63 // pred_check_branch
        %995 = sbr.rel (%p993) target = $region68
      $region67: #{wave_adversarial_loss.1} parent=63 // pred_region
        %p996 = scmp.lt.s32.totalorder %s26, 1
        %s997 = scalar_select %p996, %s26, 1
        %s998 = scalar_lea.vmem %s7, %s997
      $region68: #{wave_adversarial_loss.1} parent=63 // pred_fallthru
        _
    $region64: #{wave_adversarial_loss.1} parent=5 // pred_fallthru
      _
  $region6: #{wave_adversarial_loss.1} parent=0 // loop_footer
    %s19 = sadd.s32 1, %s15
  $region7: #{wave_adversarial_loss.1} parent=0 // loop_footer_branch
    %14 = sbr.rel target = $region3
  $region8: #{wave_adversarial_loss.1} parent=0 // loop_exit
    _

</llo_original>
